<compile_context>
chip_gen: v7x
topology: tpu7x:2x2x1
jax: 0.10.0
libtpu: 0.0.40
codegen_flags: <defaults>
</compile_context>

<pallas_src>
import math

import jax
import jax.numpy as jnp
from jax.experimental import pallas as pl
from jax.experimental.pallas import tpu as pltpu

O1 = ['sqrt', 'square', 'sin', 'cos', 'tanh', 'stand_scaler', 'minmax_scaler',
      'quan_trans', 'sigmoid', 'log', 'reciprocal']
O2 = ['+', '-', '*', '/']
OP_DIM = len(O1) + len(O2)   # 15

# 256-wide batch tiles keep the MXU M-dimension occupied while guaranteeing
# >= 2 grid steps for B > 256 (so "parallel" actually shards across v7x TCs).
_MAX_TILE_B = 256


def _round_up(n: int, m: int) -> int:
    return ((n + m - 1) // m) * m


def _opnet_kernel(x_ref, w1_ref, b1_ref, w2_ref, b2_ref, o_ref):
    """Fused fc1 -> ReLU -> out for one (net, batch-tile) grid cell.

    Block shapes (leading net axis of size 1, indexed away with [0]):
      x_ref : (1, TB, S)  compute dtype (bf16 or f32)
      w1_ref: (1, S,  H)  compute dtype
      b1_ref: (1, 1,  H)  f32
      w2_ref: (1, H,  A)  compute dtype
      b2_ref: (1, 1,  A)  f32
      o_ref : (1, TB, A)  f32
    """
    x = x_ref[0]
    w2 = w2_ref[0]
    # MXU matmul, f32 accumulation.
    h = jnp.dot(x, w1_ref[0], preferred_element_type=jnp.float32)
    # Bias + ReLU epilogue stays f32 (v5e VPU has no bf16 path).
    h = jnp.maximum(h + b1_ref[0], 0.0)
    # Back to the MXU dtype for the second matmul.
    h = h.astype(w2.dtype)
    q = jnp.dot(h, w2, preferred_element_type=jnp.float32)
    o_ref[0] = (q + b2_ref[0]).astype(o_ref.dtype)


@jax.jit
def op_net_forward_stacked(x, w1, b1, w2, b2):
    """Run the OpNet MLP for N stacked parameter sets in one pallas_call.

    x : (N, B, S) activations (cast to w1.dtype inside)
    w1: (N, S, H)   b1: (N, 1, H)   w2: (N, H, A)   b2: (N, 1, A)
    returns (N, B, A) float32 Q-values.
    """
    N, B, S = x.shape
    H = w1.shape[-1]
    A = w2.shape[-1]

    # bf16 (or f32) MXU operands; biases / accumulation stay f32.
    x = x.astype(w1.dtype)

    # Large batch tile (single tile when B is small); cdiv + zero-pad ragged B.
    tile_b = min(_MAX_TILE_B, _round_up(B, 8))
    n_btiles = pl.cdiv(B, tile_b)
    b_pad = n_btiles * tile_b
    if b_pad != B:
        x = jnp.pad(x, ((0, 0), (0, b_pad - B), (0, 0)))

    grid = (N, n_btiles)

    nbytes = lambda a: a.size * a.dtype.itemsize
    cost = pl.CostEstimate(
        flops=2 * N * b_pad * (S * H + H * A),
        transcendentals=0,
        bytes_accessed=(nbytes(x) + nbytes(w1) + nbytes(b1) + nbytes(w2)
                        + nbytes(b2) + N * b_pad * A * 4),
    )

    out = pl.pallas_call(
        _opnet_kernel,
        out_shape=jax.ShapeDtypeStruct((N, b_pad, A), jnp.float32),
        grid_spec=pltpu.PrefetchScalarGridSpec(
            num_scalar_prefetch=0,
            grid=grid,
            in_specs=[
                # x tile: depends on (net, batch-tile)
                pl.BlockSpec((1, tile_b, S), lambda n, b: (n, b, 0)),
                # Params: per-net blocks, resident across the batch axis.
                pl.BlockSpec((1, S, H), lambda n, b: (n, 0, 0)),
                pl.BlockSpec((1, 1, H), lambda n, b: (n, 0, 0)),
                pl.BlockSpec((1, H, A), lambda n, b: (n, 0, 0)),
                pl.BlockSpec((1, 1, A), lambda n, b: (n, 0, 0)),
            ],
            # Output kept at A=15 lanes (no HBM padding; see header note).
            out_specs=pl.BlockSpec((1, tile_b, A), lambda n, b: (n, b, 0)),
        ),
        compiler_params=pltpu.CompilerParams(
            dimension_semantics=("parallel", "parallel")),
        cost_estimate=cost,
    )(x, w1, b1, w2, b2)
    return out[:, :B, :]


def init_opnet_params(key, n_states, n_actions, n_hidden, init_w):
    """Re-implementation of OpNet.__init__ parameter init.

    PyTorch: weight ~ Normal(0, init_w) (explicit), bias ~ U(-1/sqrt(fan_in),
    1/sqrt(fan_in)) (nn.Linear default).  Weights stored transposed
    ([in, out]) for the kernel layout."""
    k1, k2, k3, k4 = jax.random.split(key, 4)
    w1 = init_w * jax.random.normal(k1, (n_states, n_hidden), jnp.float32)
    b1 = jax.random.uniform(k2, (1, n_hidden), jnp.float32,
                            -1.0 / math.sqrt(n_states), 1.0 / math.sqrt(n_states))
    w2 = init_w * jax.random.normal(k3, (n_hidden, n_actions), jnp.float32)
    b2 = jax.random.uniform(k4, (1, n_actions), jnp.float32,
                            -1.0 / math.sqrt(n_hidden), 1.0 / math.sqrt(n_hidden))
    return (w1, b1, w2, b2)


class OpDQNNetworkPallas:
    """Mirrors OpDQNNetwork.forward semantics (eval_net vs target_net).

    Both nets' parameters are stacked on a leading axis of size 2 so the
    q_eval / q_next pair of a DQN step runs in ONE fused pallas_call
    (forward_both); forward() keeps the original single-net API."""

    def __init__(self, state_dim, hidden_dim, init_w=1e-6, seed=0,
                 compute_dtype=jnp.bfloat16):
        key = jax.random.PRNGKey(seed)
        ke, kt = jax.random.split(key)
        ev = init_opnet_params(ke, state_dim, OP_DIM, hidden_dim, init_w)
        tg = init_opnet_params(kt, state_dim, OP_DIM, hidden_dim, init_w)
        # Stacked master params (f32): index 0 = eval_net, 1 = target_net.
        self.w1 = jnp.stack([ev[0], tg[0]])   # (2, S, H)
        self.b1 = jnp.stack([ev[1], tg[1]])   # (2, 1, H)
        self.w2 = jnp.stack([ev[2], tg[2]])   # (2, H, A)
        self.b2 = jnp.stack([ev[3], tg[3]])   # (2, 1, A)
        # Pre-cast MXU operands once (bf16 on all current TPU gens); biases f32.
        self.compute_dtype = compute_dtype
        self.w1_c = self.w1.astype(compute_dtype)
        self.w2_c = self.w2.astype(compute_dtype)

    def forward(self, cluster_state, for_next=False):
        """cluster_state: (B, state_dim) -> (B, OP_DIM) Q-values."""
        i = 1 if for_next else 0
        q = op_net_forward_stacked(
            cluster_state[None],
            self.w1_c[i:i + 1], self.b1[i:i + 1],
            self.w2_c[i:i + 1], self.b2[i:i + 1])
        return q[0]

    def forward_both(self, eval_state, target_state):
        """Fused q_eval / q_next (one kernel launch per DQN update step)."""
        x = jnp.stack([eval_state, target_state])          # (2, B, S)
        q = op_net_forward_stacked(x, self.w1_c, self.b1, self.w2_c, self.b2)
        return q[0], q[1]


if __name__ == "__main__":
    # Small shapes consistent with the module: batch=8, state_dim=32, hidden=32.
    B, STATE_DIM, HIDDEN = 8, 32, 32

    key = jax.random.PRNGKey(0)
    kx1, kx2, kx3 = jax.random.split(key, 3)
    x = jax.random.normal(kx1, (B, STATE_DIM), jnp.float32)
    x2 = jax.random.normal(kx2, (B, STATE_DIM), jnp.float32)
    x_ragged = jax.random.normal(kx3, (100, STATE_DIM), jnp.float32)  # cdiv+pad path

    def ref(xin, w1, b1, w2, b2, dt):
        h = jnp.dot(xin.astype(dt), w1.astype(dt),
                    preferred_element_type=jnp.float32) + b1
        h = jnp.maximum(h, 0.0)
        return jnp.dot(h.astype(dt), w2.astype(dt),
                       preferred_element_type=jnp.float32) + b2

    # Default bf16-MXU path (f32 accumulation + f32 epilogue).
    net = OpDQNNetworkPallas(STATE_DIM, HIDDEN, init_w=1e-6, seed=0)
    q_eval = net.forward(x, for_next=False)         # eval_net
    q_next = net.forward(x, for_next=True)          # target_net
    q_e2, q_n2 = net.forward_both(x, x2)            # fused: one launch for both
    q_rag = net.forward(x_ragged)                   # ragged batch (pad+slice)
    jax.block_until_ready((q_eval, q_next, q_e2, q_n2, q_rag))

    dt = net.compute_dtype
    assert q_eval.shape == (B, OP_DIM) and q_next.shape == (B, OP_DIM)
    assert q_rag.shape == (100, OP_DIM)
    assert jnp.allclose(q_eval, ref(x, net.w1[0], net.b1[0], net.w2[0], net.b2[0], dt), atol=1e-4)
    assert jnp.allclose(q_next, ref(x, net.w1[1], net.b1[1], net.w2[1], net.b2[1], dt), atol=1e-4)
    assert jnp.allclose(q_e2, ref(x, net.w1[0], net.b1[0], net.w2[0], net.b2[0], dt), atol=1e-4)
    assert jnp.allclose(q_n2, ref(x2, net.w1[1], net.b1[1], net.w2[1], net.b2[1], dt), atol=1e-4)
    assert jnp.allclose(q_rag, ref(x_ragged, net.w1[0], net.b1[0], net.w2[0], net.b2[0], dt), atol=1e-4)

    # f32 path: exact-tolerance check (init_w=1e-6 weights, per review note).
    net32 = OpDQNNetworkPallas(STATE_DIM, HIDDEN, init_w=1e-6, seed=0,
                               compute_dtype=jnp.float32)
    q32 = net32.forward(x)
    jax.block_until_ready(q32)
    assert jnp.allclose(
        q32, ref(x, net32.w1[0], net32.b1[0], net32.w2[0], net32.b2[0], jnp.float32),
        atol=1e-5)

    print("KERNEL_OK")
</pallas_src>

<mosaic_0001>
module attributes {stable_mosaic.version = 11 : i64} {
  func.func @_opnet_kernel(%arg0: i32, %arg1: i32, %arg2: memref<1x8x32xbf16, #tpu.memory_space<vmem>>, %arg3: memref<1x32x32xbf16, #tpu.memory_space<vmem>>, %arg4: memref<1x1x32xf32, #tpu.memory_space<vmem>>, %arg5: memref<1x32x15xbf16, #tpu.memory_space<vmem>>, %arg6: memref<1x1x15xf32, #tpu.memory_space<vmem>>, %arg7: memref<1x8x15xf32, #tpu.memory_space<vmem>>) attributes {dimension_semantics = [#tpu.dimension_semantics<parallel>, #tpu.dimension_semantics<parallel>], iteration_bounds = array<i64: 1, 1>, scalar_prefetch = 0 : i64, scratch_operands = 0 : i64, tpu.core_type = #tpu.core_type<tc>, window_params = [{transform_indices = @transform_0, window_bounds = array<i64: 1, 8, 32>}, {transform_indices = @transform_1, window_bounds = array<i64: 1, 32, 32>}, {transform_indices = @transform_2, window_bounds = array<i64: 1, 1, 32>}, {transform_indices = @transform_3, window_bounds = array<i64: 1, 32, 15>}, {transform_indices = @transform_4, window_bounds = array<i64: 1, 1, 15>}, {transform_indices = @transform_5, window_bounds = array<i64: 1, 8, 15>}]} {
    %c0 = arith.constant 0 : index
    %c0_0 = arith.constant 0 : index
    %c0_1 = arith.constant 0 : index
    %0 = vector.load %arg2[%c0, %c0_0, %c0_1] : memref<1x8x32xbf16, #tpu.memory_space<vmem>>, vector<1x8x32xbf16>
    %1 = vector.shape_cast %0 : vector<1x8x32xbf16> to vector<8x32xbf16>
    %c0_2 = arith.constant 0 : index
    %c0_3 = arith.constant 0 : index
    %c0_4 = arith.constant 0 : index
    %2 = vector.load %arg5[%c0_2, %c0_3, %c0_4] : memref<1x32x15xbf16, #tpu.memory_space<vmem>>, vector<1x32x15xbf16>
    %3 = vector.shape_cast %2 : vector<1x32x15xbf16> to vector<32x15xbf16>
    %c0_5 = arith.constant 0 : index
    %c0_6 = arith.constant 0 : index
    %c0_7 = arith.constant 0 : index
    %4 = vector.load %arg3[%c0_5, %c0_6, %c0_7] : memref<1x32x32xbf16, #tpu.memory_space<vmem>>, vector<1x32x32xbf16>
    %5 = vector.shape_cast %4 : vector<1x32x32xbf16> to vector<32x32xbf16>
    %cst = arith.constant dense<0.000000e+00> : vector<8x32xf32>
    %6 = tpu.matmul %1, %5, %cst {dimension_numbers = #tpu.dot_dimension_numbers<[1], [0], [0], [1], [0, 0, 1, 1], [], []>} : vector<8x32xbf16>, vector<32x32xbf16>, vector<8x32xf32> -> vector<8x32xf32>
    %c0_8 = arith.constant 0 : index
    %c0_9 = arith.constant 0 : index
    %c0_10 = arith.constant 0 : index
    %7 = vector.load %arg4[%c0_8, %c0_9, %c0_10] : memref<1x1x32xf32, #tpu.memory_space<vmem>>, vector<1x1x32xf32>
    %8 = vector.shape_cast %7 : vector<1x1x32xf32> to vector<1x32xf32>
    %9 = vector.broadcast %8 : vector<1x32xf32> to vector<8x32xf32>
    %10 = arith.addf %6, %9 : vector<8x32xf32>
    %cst_11 = arith.constant 0.000000e+00 : f32
    %11 = vector.broadcast %cst_11 : f32 to vector<8x32xf32>
    %12 = arith.maximumf %10, %11 : vector<8x32xf32>
    %13 = arith.truncf %12 : vector<8x32xf32> to vector<8x32xbf16>
    %cst_12 = arith.constant dense<0.000000e+00> : vector<8x15xf32>
    %14 = tpu.matmul %13, %3, %cst_12 {dimension_numbers = #tpu.dot_dimension_numbers<[1], [0], [0], [1], [0, 0, 1, 1], [], []>} : vector<8x32xbf16>, vector<32x15xbf16>, vector<8x15xf32> -> vector<8x15xf32>
    %c0_13 = arith.constant 0 : index
    %c0_14 = arith.constant 0 : index
    %c0_15 = arith.constant 0 : index
    %15 = vector.load %arg6[%c0_13, %c0_14, %c0_15] : memref<1x1x15xf32, #tpu.memory_space<vmem>>, vector<1x1x15xf32>
    %16 = vector.shape_cast %15 : vector<1x1x15xf32> to vector<1x15xf32>
    %17 = vector.broadcast %16 : vector<1x15xf32> to vector<8x15xf32>
    %18 = arith.addf %14, %17 : vector<8x15xf32>
    %c0_16 = arith.constant 0 : index
    %c0_17 = arith.constant 0 : index
    %c0_18 = arith.constant 0 : index
    %19 = vector.load %arg7[%c0_16, %c0_17, %c0_18] : memref<1x8x15xf32, #tpu.memory_space<vmem>>, vector<1x8x15xf32>
    %20 = vector.shape_cast %19 : vector<1x8x15xf32> to vector<8x15xf32>
    %21 = vector.shape_cast %18 : vector<8x15xf32> to vector<1x8x15xf32>
    tpu.vector_store %arg7[%c0_16, %c0_17, %c0_18], %21 {strides = array<i32>} : memref<1x8x15xf32, #tpu.memory_space<vmem>>, vector<1x8x15xf32>,
    return
  }
  func.func @transform_0(%arg0: i32, %arg1: i32) -> (i32, i32, i32) {
    %c0_i32 = arith.constant 0 : i32
    %c0_i32_0 = arith.constant 0 : i32
    return %arg0, %arg1, %c0_i32 : i32, i32, i32
  }
  func.func @transform_1(%arg0: i32, %arg1: i32) -> (i32, i32, i32) {
    %c0_i32 = arith.constant 0 : i32
    %c0_i32_0 = arith.constant 0 : i32
    %c0_i32_1 = arith.constant 0 : i32
    return %arg0, %c0_i32, %c0_i32_0 : i32, i32, i32
  }
  func.func @transform_2(%arg0: i32, %arg1: i32) -> (i32, i32, i32) {
    %c0_i32 = arith.constant 0 : i32
    %c0_i32_0 = arith.constant 0 : i32
    %c0_i32_1 = arith.constant 0 : i32
    return %arg0, %c0_i32, %c0_i32_0 : i32, i32, i32
  }
  func.func @transform_3(%arg0: i32, %arg1: i32) -> (i32, i32, i32) {
    %c0_i32 = arith.constant 0 : i32
    %c0_i32_0 = arith.constant 0 : i32
    %c0_i32_1 = arith.constant 0 : i32
    return %arg0, %c0_i32, %c0_i32_0 : i32, i32, i32
  }
  func.func @transform_4(%arg0: i32, %arg1: i32) -> (i32, i32, i32) {
    %c0_i32 = arith.constant 0 : i32
    %c0_i32_0 = arith.constant 0 : i32
    %c0_i32_1 = arith.constant 0 : i32
    return %arg0, %c0_i32, %c0_i32_0 : i32, i32, i32
  }
  func.func @transform_5(%arg0: i32, %arg1: i32) -> (i32, i32, i32) {
    %c0_i32 = arith.constant 0 : i32
    %c0_i32_0 = arith.constant 0 : i32
    return %arg0, %arg1, %c0_i32 : i32, i32, i32
  }
}

</mosaic_0001>

<llo_original>
// kernel: op_net_forward_stacked.1
$region0: #{op_net_forward_stacked.1}
  #allocation0 [shape = 'u32[]', space=smem, size = 0x4, offset = 0x4, fixed_abs, tag = 'smem constant byte address 0x4 - core index']
  #allocation1 [shape = 'u32[144,128]{1,0:T(1,128)}', space=vmem, size = 0x12000, scoped, tag = 'internal scratch']
  %s0 = inlined_call_operand.vmem [shape: bf16[1,8,32], index: 0, kind: input, shape index: {}]
  %s1 = inlined_call_operand.vmem [shape: bf16[1,32,32], index: 1, kind: input, shape index: {}]
  %s2 = inlined_call_operand.vmem [shape: f32[1,1,32], index: 2, kind: input, shape index: {}]
  %s3 = inlined_call_operand.vmem [shape: bf16[1,32,15], index: 3, kind: input, shape index: {}]
  %s4 = inlined_call_operand.vmem [shape: f32[1,1,15], index: 4, kind: input, shape index: {}]
  %s5 = inlined_call_operand.hbm [shape: f32[1,8,15], index: 5, kind: output, shape index: {}]
  %s6 = sld [smem:[#allocation0]]
  $region30: #{op_net_forward_stacked.1} parent=0
    _
  %s8 = ssub.s32 1, %s6
  %s9 = scalar_select 0, %s8, %s6
  $region1: #{op_net_forward_stacked.1} parent=0
    #allocation2 [shape = 'u8[4096]{0}', space=vmem, size = 0x1000, scoped, tag = 'output window, operand 0, single buffered']
    #allocation3 [shape = 's32[1]{0}', space=sflag, size = 0x4, scoped, tag = 'scoped memory for op_net_forward_stacked.1']
    %10 = vsyncpa [#allocation3], 0
    // Predicated region
    $region2: #{op_net_forward_stacked.1} parent=1 // pred_check
      _
    $region3: #{op_net_forward_stacked.1} parent=1 // pred_check_branch
      %12 = sbr.rel (0) target = $region5
    $region4: #{op_net_forward_stacked.1} parent=1 // pred_region
      _
    $region5: #{op_net_forward_stacked.1} parent=1 // pred_fallthru
      _
    // Predicated region
    $region6: #{op_net_forward_stacked.1} parent=1 // pred_check
      _
    $region7: #{op_net_forward_stacked.1} parent=1 // pred_check_branch
      %14 = sbr.rel (0) target = $region9
    $region8: #{op_net_forward_stacked.1} parent=1 // pred_region
      _
    $region9: #{op_net_forward_stacked.1} parent=1 // pred_fallthru
      _
    // Predicated region
    $region10: #{op_net_forward_stacked.1} parent=1 // pred_check
      _
    $region11: #{op_net_forward_stacked.1} parent=1 // pred_check_branch
      %16 = sbr.rel (0) target = $region13
    $region12: #{op_net_forward_stacked.1} parent=1 // pred_region
      _
    $region13: #{op_net_forward_stacked.1} parent=1 // pred_fallthru
      _
    // Predicated region
    $region14: #{op_net_forward_stacked.1} parent=1 // pred_check
      _
    $region15: #{op_net_forward_stacked.1} parent=1 // pred_check_branch
      %18 = sbr.rel (0) target = $region17
    $region16: #{op_net_forward_stacked.1} parent=1 // pred_region
      _
    $region17: #{op_net_forward_stacked.1} parent=1 // pred_fallthru
      _
    // Predicated region
    $region18: #{op_net_forward_stacked.1} parent=1 // pred_check
      _
    $region19: #{op_net_forward_stacked.1} parent=1 // pred_check_branch
      %20 = sbr.rel (0) target = $region21
    $region20: #{op_net_forward_stacked.1} parent=1 // pred_region
      _
    $region21: #{op_net_forward_stacked.1} parent=1 // pred_fallthru
      _
    %v22 = vld [vmem:[%s0] sm:$0xf]
    %v23 = vld [vmem:[%s3] sm:$0xf]
    %v24 = vld [vmem:[%s3 + $0x4] sm:$0xf]
    %v25 = vld [vmem:[%s3 + $0x8] sm:$0xf]
    %v26 = vld [vmem:[%s3 + $0xc] sm:$0xf]
    %v27 = vld [vmem:[%s1] sm:$0xf]
    %v28 = vld [vmem:[%s1 + $0x4] sm:$0xf]
    %v29 = vld [vmem:[%s1 + $0x8] sm:$0xf]
    %v30 = vld [vmem:[%s1 + $0xc] sm:$0xf]
    %v31 = vld [vmem:[%s2] sm:$0x1]
    %v33 = vlaneseq
    %v34 = vshrl.u32 %v33, 7
    %v35 = vsub.s32 0, %v34
    %v36 = vrot.slane %v31, %v35
    %v42 = vunpack.c.l.b16 %v27
    %v43 = vunpack.c.l.b16 %v28
    %v44 = vunpack.c.l.b16 %v29
    %v45 = vunpack.c.l.b16 %v30
    %v46 = vpack.c.b16 %v43, %v42
    %v47 = vpack.c.b16 %v45, %v44
    %vm50 = vcmask 261120
    %v52 = vsel %vm50, %v22, 0
    %54 = vmatprep.subr.bf16.mxu0 0
    %55 = vmatpush1.bf16.msra.mxu0 %v46
    %56 = vmatprep.subr.bf16.mxu0 0
    %57 = vmatpush1.bf16.msra.mxu0 %v47
    %58 = vmatprep.subr.bf16.mxu0 0
    %59 = vmatpush1.bf16.msra.mxu0 0
    %60 = vmatprep.subr.bf16.mxu0 0
    %61 = vmatpush1.bf16.msra.mxu0 0
    %62 = vmatprep.subr.bf16.mxu0 0
    %63 = vmatpush1.bf16.msra.mxu0 0
    %64 = vmatprep.subr.bf16.mxu0 0
    %65 = vmatpush1.bf16.msra.mxu0 0
    %66 = vmatprep.subr.bf16.mxu0 0
    %67 = vmatpush1.bf16.msra.mxu0 0
    %68 = vmatprep.subr.bf16.mxu0 0
    %69 = vmatpush1.bf16.msra.mxu0 0
    %70 = vmatprep.subr.bf16.mxu0 0
    %71 = vmatpush1.bf16.msra.mxu0 0
    %72 = vmatprep.subr.bf16.mxu0 0
    %73 = vmatpush1.bf16.msra.mxu0 0
    %74 = vmatprep.subr.bf16.mxu0 0
    %75 = vmatpush1.bf16.msra.mxu0 0
    %76 = vmatprep.subr.bf16.mxu0 0
    %77 = vmatpush1.bf16.msra.mxu0 0
    %78 = vmatprep.subr.bf16.mxu0 0
    %79 = vmatpush1.bf16.msra.mxu0 0
    %80 = vmatprep.subr.bf16.mxu0 0
    %81 = vmatpush1.bf16.msra.mxu0 0
    %82 = vmatprep.subr.bf16.mxu0 0
    %83 = vmatpush1.bf16.msra.mxu0 0
    %84 = vmatprep.subr.bf16.mxu0 0
    %85 = vmatpush1.bf16.msra.mxu0 0
    %86 = vmatprep.mubr.bf16.mxu0 0
    %87 = vmatmul.mubr.bf16.gmra.mrb[0].mxu0 %v52
    %v88 = vpop.f32.mrb[0].mxu0
    %v89 = vadd.f32 %v36, %v88
    %v90 = vpop.f32.mrb[0].mxu0
    %v91 = vpop.f32.mrb[0].mxu0
    %v92 = vpop.f32.mrb[0].mxu0
    %93 = vdwg.mxu0
    %v94 = vmax.f32 %v89, 0.0
    %v95 = vpack.c.bf16 %v94, %v94
    %v96 = vld [vmem:[%s4] sm:$0x1]
    %v98 = vlaneseq
    %v99 = vshrl.u32 %v98, 7
    %v100 = vsub.s32 0, %v99
    %v101 = vrot.slane %v96, %v100
    %v107 = vunpack.c.l.b16 %v23
    %v108 = vunpack.c.l.b16 %v24
    %v109 = vunpack.c.l.b16 %v25
    %v110 = vunpack.c.l.b16 %v26
    %v111 = vpack.c.b16 %v108, %v107
    %v112 = vpack.c.b16 %v110, %v109
    %v116 = vsel %vm50, %v95, 0
    %118 = vmatprep.subr.bf16.mxu0 0
    %119 = vmatpush1.bf16.msra.mxu0 %v111
    %120 = vmatprep.subr.bf16.mxu0 0
    %121 = vmatpush1.bf16.msra.mxu0 %v112
    %122 = vmatprep.subr.bf16.mxu0 0
    %123 = vmatpush1.bf16.msra.mxu0 0
    %124 = vmatprep.subr.bf16.mxu0 0
    %125 = vmatpush1.bf16.msra.mxu0 0
    %126 = vmatprep.subr.bf16.mxu0 0
    %127 = vmatpush1.bf16.msra.mxu0 0
    %128 = vmatprep.subr.bf16.mxu0 0
    %129 = vmatpush1.bf16.msra.mxu0 0
    %130 = vmatprep.subr.bf16.mxu0 0
    %131 = vmatpush1.bf16.msra.mxu0 0
    %132 = vmatprep.subr.bf16.mxu0 0
    %133 = vmatpush1.bf16.msra.mxu0 0
    %134 = vmatprep.subr.bf16.mxu0 0
    %135 = vmatpush1.bf16.msra.mxu0 0
    %136 = vmatprep.subr.bf16.mxu0 0
    %137 = vmatpush1.bf16.msra.mxu0 0
    %138 = vmatprep.subr.bf16.mxu0 0
    %139 = vmatpush1.bf16.msra.mxu0 0
    %140 = vmatprep.subr.bf16.mxu0 0
    %141 = vmatpush1.bf16.msra.mxu0 0
    %142 = vmatprep.subr.bf16.mxu0 0
    %143 = vmatpush1.bf16.msra.mxu0 0
    %144 = vmatprep.subr.bf16.mxu0 0
    %145 = vmatpush1.bf16.msra.mxu0 0
    %146 = vmatprep.subr.bf16.mxu0 0
    %147 = vmatpush1.bf16.msra.mxu0 0
    %148 = vmatprep.subr.bf16.mxu0 0
    %149 = vmatpush1.bf16.msra.mxu0 0
    %150 = vmatprep.mubr.bf16.mxu0 0
    %151 = vmatmul.mubr.bf16.gmra.mrb[0].mxu0 %v116
    %v152 = vpop.f32.mrb[0].mxu0
    %v153 = vadd.f32 %v101, %v152
    %v154 = vpop.f32.mrb[0].mxu0
    %v155 = vpop.f32.mrb[0].mxu0
    %v156 = vpop.f32.mrb[0].mxu0
    %157 = vdwg.mxu0
    %vm158 = vcmask 121856
    %159 = vst.msk [vmem:[#allocation2] sm:$0xff] %vm158, %v153
    // Predicated region
    $region22: #{op_net_forward_stacked.1} parent=1 // pred_check
      _
    $region23: #{op_net_forward_stacked.1} parent=1 // pred_check_branch
      %161 = sbr.rel (0) target = $region25
    $region24: #{op_net_forward_stacked.1} parent=1 // pred_region
      %s163 = ssub.s32 128, 128
      %164 = vsyncadd [#allocation3], %s163
      %s166 = sshll.u32 [#allocation2], 4
      %s167 = int_to_ptr.vmem [resolvable:$true] %s166
      %169 = dma.vmem_to_hbm [thread:$0]  %s167, 128, %s5, [#allocation3]
    $region25: #{op_net_forward_stacked.1} parent=1 // pred_fallthru
      _
    // Predicated region
    $region26: #{op_net_forward_stacked.1} parent=1 // pred_check
      _
    $region27: #{op_net_forward_stacked.1} parent=1 // pred_check_branch
      %171 = sbr.rel (0) target = $region29
    $region28: #{op_net_forward_stacked.1} parent=1 // pred_region
      %172 = dma.done [#allocation3], 128
    $region29: #{op_net_forward_stacked.1} parent=1 // pred_fallthru
      _
    %173 = vsyncpa [#allocation3], 1

</llo_original>
